<compile_context>
chip_gen: v7x
topology: tpu7x:2x2x1
jax: 0.10.0
libtpu: 0.0.40
codegen_flags: <defaults>
</compile_context>

<pallas_src>
import math
import functools

import jax
import jax.numpy as jnp
from jax.experimental import pallas as pl
from jax.experimental.pallas import tpu as pltpu


def _round_up(x, m):
    return ((x + m - 1) // m) * m


def _choose_batch_block(B, Lq, target_m=128):
    """How many batch rows to fuse per grid step.

    Aim for merged M (= Bb*Lq) >= target_m so the weight matmuls fill the MXU,
    but keep at least 2 grid steps when B >= 2 so dual-TC chips (v7x) use both
    cores.  Bb must divide B.
    """
    want = max(1, -(-target_m // max(Lq, 1)))          # ceil(target_m / Lq)
    if B >= 2:
        want = min(want, B // 2)
    want = max(1, want)
    bb = 1
    for d in range(1, want + 1):
        if B % d == 0:
            bb = d
    return bb


def _fusion_kernel(bert_ref, know_ref, w1w2a_ref, b1_ref, w2b_ref, b2_ref,
                   out_ref, *, d_k, d_k_pad):
    Bb, Lq, Dqp = bert_ref.shape                       # bf16 (Bb, Lq, d_q_pad)
    _, Lk, _ = know_ref.shape                          # bf16 (Bb, Lk, d_k_pad)

    # ---- merged-M weight matmul:  bert @ [W1 | W2a]  (single wide MXU issue) ----
    bert2d = bert_ref[...].reshape(Bb * Lq, Dqp)       # bf16 (M, d_q_pad)
    fused = jnp.dot(bert2d, w1w2a_ref[...],
                    preferred_element_type=jnp.float32)   # f32 (M, d_k_pad + d_q_pad)
    bf = fused[:, :d_k_pad] + b1_ref[...]              # f32 (M, d_k_pad)   == w1(bert)
    bert_w2a = fused[:, d_k_pad:]                      # f32 (M, d_q_pad)   == bert @ W2a

    know = know_ref[...]                               # bf16 (Bb, Lk, d_k_pad)

    # ---- scores = bf @ know^T / sqrt(d_k): batched, contraction on last dims ----
    q = bf.reshape(Bb, Lq, d_k_pad).astype(jnp.bfloat16)
    scores = jax.lax.dot_general(
        q, know,
        dimension_numbers=(((2,), (2,)), ((0,), (0,))),
        preferred_element_type=jnp.float32) * (1.0 / math.sqrt(d_k))

    # ---- numerically-stable softmax over Lk (f32 math) ----
    m = jnp.max(scores, axis=-1, keepdims=True)
    e = jnp.exp(scores - m)
    denom = jnp.sum(e, axis=-1, keepdims=True)
    p = e * pl.reciprocal(denom, approx=True)          # f32 (Bb, Lq, Lk)

    # ---- attention output = p @ know  (v == k == knowledge_feature) ----
    attn = jax.lax.dot_general(
        p.astype(jnp.bfloat16), know,
        dimension_numbers=(((2,), (1,)), ((0,), (0,))),
        preferred_element_type=jnp.float32)            # f32 (Bb, Lq, d_k_pad)

    # ---- w2(cat([bert, attn])) == bert @ W2a + attn @ W2b + b2 ----
    attn2d = attn.reshape(Bb * Lq, d_k_pad).astype(jnp.bfloat16)
    out = bert_w2a + jnp.dot(attn2d, w2b_ref[...],
                             preferred_element_type=jnp.float32) + b2_ref[...]

    out_ref[...] = out.reshape(Bb, Lq, Dqp).astype(out_ref.dtype)


def attention_fusion(bert_feature, knowledge_feature, params):
    """bert_feature: (B, Lq, d_q), knowledge_feature: (B, Lk, d_k) -> (B, Lq, d_q)."""
    B, Lq, d_q = bert_feature.shape
    _, Lk, d_k = knowledge_feature.shape
    w1, b1, w2a, w2b, b2 = params   # (d_q,d_k), (1,d_k), (d_q,d_q), (d_k,d_q), (1,d_q)

    d_q_pad = _round_up(d_q, 128)
    d_k_pad = _round_up(d_k, 128)

    # Lane-dense, bf16 MXU operands (f32 accumulation in-kernel; softmax in f32).
    bert_p = jnp.zeros((B, Lq, d_q_pad), jnp.bfloat16)
    bert_p = bert_p.at[:, :, :d_q].set(bert_feature.astype(jnp.bfloat16))
    know_p = jnp.zeros((B, Lk, d_k_pad), jnp.bfloat16)
    know_p = know_p.at[:, :, :d_k].set(knowledge_feature.astype(jnp.bfloat16))

    # Pack [W1 | W2a] along the output dim; zero-pad all weight/bias dims to 128
    # multiples so every in-kernel slice / store is a clean lane-tile.
    w1w2a = jnp.zeros((d_q_pad, d_k_pad + d_q_pad), jnp.bfloat16)
    w1w2a = w1w2a.at[:d_q, :d_k].set(w1.astype(jnp.bfloat16))
    w1w2a = w1w2a.at[:d_q, d_k_pad:d_k_pad + d_q].set(w2a.astype(jnp.bfloat16))
    w2b_p = jnp.zeros((d_k_pad, d_q_pad), jnp.bfloat16)
    w2b_p = w2b_p.at[:d_k, :d_q].set(w2b.astype(jnp.bfloat16))
    b1_p = jnp.zeros((1, d_k_pad), jnp.float32).at[:, :d_k].set(b1)
    b2_p = jnp.zeros((1, d_q_pad), jnp.float32).at[:, :d_q].set(b2)

    Bb = _choose_batch_block(B, Lq)
    grid = (B // Bb,)

    kernel = functools.partial(_fusion_kernel, d_k=d_k, d_k_pad=d_k_pad)

    flops = 2 * B * Lq * (d_q_pad * (d_k_pad + d_q_pad)
                          + 2 * Lk * d_k_pad + d_k_pad * d_q_pad)
    bytes_accessed = (bert_p.size * 2 + know_p.size * 2 + w1w2a.size * 2
                      + w2b_p.size * 2 + (b1_p.size + b2_p.size) * 4
                      + B * Lq * d_q_pad * 4)

    # NOTE: the weight/bias specs use constant index maps, so Pallas fetches them
    # once; for production-size d_q/d_k on v7x (64 MiB VMEM), pl.Buffered(1) on
    # those specs and an explicit vmem_limit_bytes would trim the spare buffer.
    out_padded = pl.pallas_call(
        kernel,
        out_shape=jax.ShapeDtypeStruct((B, Lq, d_q_pad), jnp.float32),
        grid_spec=pltpu.PrefetchScalarGridSpec(
            num_scalar_prefetch=0,
            grid=grid,
            in_specs=[
                pl.BlockSpec((Bb, Lq, d_q_pad), lambda b: (b, 0, 0)),            # bert tile
                pl.BlockSpec((Bb, Lk, d_k_pad), lambda b: (b, 0, 0)),            # knowledge tile
                pl.BlockSpec((d_q_pad, d_k_pad + d_q_pad), lambda b: (0, 0)),    # [W1 | W2a]
                pl.BlockSpec((1, d_k_pad), lambda b: (0, 0)),                    # b1
                pl.BlockSpec((d_k_pad, d_q_pad), lambda b: (0, 0)),              # W2b
                pl.BlockSpec((1, d_q_pad), lambda b: (0, 0)),                    # b2
            ],
            out_specs=pl.BlockSpec((Bb, Lq, d_q_pad), lambda b: (b, 0, 0)),
        ),
        compiler_params=pltpu.CompilerParams(
            dimension_semantics=("parallel",)),
        cost_estimate=pl.CostEstimate(
            flops=flops,
            transcendentals=B * Lq * Lk,
            bytes_accessed=bytes_accessed),
    )(bert_p, know_p, w1w2a, b1_p, w2b_p, b2_p)

    # Strip lane padding (kernel stores stay lane-dense; this slice is a cheap XLA op).
    return out_padded[:, :, :d_q]


def init_params(key, d_q, d_k):
    """Deterministic init matching nn.Linear(d_q, d_k) and nn.Linear(d_q+d_k, d_q)."""
    k1, k2, k3, k4 = jax.random.split(key, 4)
    lim1 = 1.0 / math.sqrt(d_q)
    lim2 = 1.0 / math.sqrt(d_q + d_k)
    # Stored as (in, out) == W^T of the PyTorch (out, in) weight.
    w1 = jax.random.uniform(k1, (d_q, d_k), jnp.float32, -lim1, lim1)
    b1 = jax.random.uniform(k2, (1, d_k), jnp.float32, -lim1, lim1)
    w2 = jax.random.uniform(k3, (d_q + d_k, d_q), jnp.float32, -lim2, lim2)
    b2 = jax.random.uniform(k4, (1, d_q), jnp.float32, -lim2, lim2)
    w2a, w2b = w2[:d_q], w2[d_q:]
    return w1, b1, w2a, w2b, b2


def reference(bert_feature, knowledge_feature, params, d_k):
    """Exact f32 reference matching the PyTorch module forward."""
    w1, b1, w2a, w2b, b2 = params
    bf = bert_feature @ w1 + b1
    scores = jnp.einsum("bqd,bkd->bqk", bf, knowledge_feature) / math.sqrt(d_k)
    p = jax.nn.softmax(scores, axis=-1)
    attn = jnp.einsum("bqk,bkd->bqd", p, knowledge_feature)
    return bert_feature @ w2a + attn @ w2b + b2


if __name__ == "__main__":
    # TODO(synk): dropout on the attention scores is not implemented (module is
    # constructed with dropout=None and never applies it in forward).
    B, Lq, Lk, d_q, d_k = 2, 8, 8, 32, 32

    key = jax.random.PRNGKey(0)
    kb, kk, kp = jax.random.split(key, 3)
    bert_feature = jax.random.normal(kb, (B, Lq, d_q), jnp.float32)
    knowledge_feature = jax.random.normal(kk, (B, Lk, d_k), jnp.float32)
    params = init_params(kp, d_q, d_k)

    out = attention_fusion(bert_feature, knowledge_feature, params)
    out = jax.block_until_ready(out)

    ref = reference(bert_feature, knowledge_feature, params, d_k)
    assert out.shape == (B, Lq, d_q)
    # bf16 MXU operands (f32 accumulation) -> small numeric delta vs exact-f32 reference.
    assert jnp.allclose(out, ref, atol=2e-2, rtol=2e-2), "mismatch vs reference"

    print("KERNEL_OK")
</pallas_src>

<mosaic_0001>
module attributes {stable_mosaic.version = 11 : i64} {
  func.func @_fusion_kernel(%arg0: i32, %arg1: memref<1x8x128xbf16, #tpu.memory_space<vmem>>, %arg2: memref<1x8x128xbf16, #tpu.memory_space<vmem>>, %arg3: memref<128x256xbf16, #tpu.memory_space<vmem>>, %arg4: memref<1x128xf32, #tpu.memory_space<vmem>>, %arg5: memref<128x128xbf16, #tpu.memory_space<vmem>>, %arg6: memref<1x128xf32, #tpu.memory_space<vmem>>, %arg7: memref<1x8x128xf32, #tpu.memory_space<vmem>>) attributes {dimension_semantics = [#tpu.dimension_semantics<parallel>], iteration_bounds = array<i64: 2>, scalar_prefetch = 0 : i64, scratch_operands = 0 : i64, tpu.core_type = #tpu.core_type<tc>, window_params = [{transform_indices = @transform_0, window_bounds = array<i64: 1, 8, 128>}, {transform_indices = @transform_1, window_bounds = array<i64: 1, 8, 128>}, {pipeline_mode = #tpu.pipeline_mode<synchronous>, transform_indices = @transform_2, window_bounds = array<i64: 128, 256>}, {pipeline_mode = #tpu.pipeline_mode<synchronous>, transform_indices = @transform_3, window_bounds = array<i64: 1, 128>}, {pipeline_mode = #tpu.pipeline_mode<synchronous>, transform_indices = @transform_4, window_bounds = array<i64: 128, 128>}, {pipeline_mode = #tpu.pipeline_mode<synchronous>, transform_indices = @transform_5, window_bounds = array<i64: 1, 128>}, {transform_indices = @transform_6, window_bounds = array<i64: 1, 8, 128>}]} {
    %c0 = arith.constant 0 : index
    %c0_0 = arith.constant 0 : index
    %c0_1 = arith.constant 0 : index
    %0 = vector.load %arg1[%c0, %c0_0, %c0_1] : memref<1x8x128xbf16, #tpu.memory_space<vmem>>, vector<1x8x128xbf16>
    %1 = vector.shape_cast %0 : vector<1x8x128xbf16> to vector<8x128xbf16>
    %c0_2 = arith.constant 0 : index
    %c0_3 = arith.constant 0 : index
    %2 = vector.load %arg3[%c0_2, %c0_3] : memref<128x256xbf16, #tpu.memory_space<vmem>>, vector<128x256xbf16>
    %cst = arith.constant dense<0.000000e+00> : vector<8x256xf32>
    %3 = tpu.matmul %1, %2, %cst {dimension_numbers = #tpu.dot_dimension_numbers<[1], [0], [0], [1], [0, 0, 1, 1], [], []>} : vector<8x128xbf16>, vector<128x256xbf16>, vector<8x256xf32> -> vector<8x256xf32>
    %4 = vector.extract_strided_slice %3 {offsets = [0, 0], sizes = [8, 128], strides = [1, 1]} : vector<8x256xf32> to vector<8x128xf32>
    %c0_4 = arith.constant 0 : index
    %c0_5 = arith.constant 0 : index
    %5 = vector.load %arg4[%c0_4, %c0_5] : memref<1x128xf32, #tpu.memory_space<vmem>>, vector<1x128xf32>
    %6 = vector.broadcast %5 : vector<1x128xf32> to vector<8x128xf32>
    %7 = arith.addf %4, %6 : vector<8x128xf32>
    %8 = vector.extract_strided_slice %3 {offsets = [0, 128], sizes = [8, 128], strides = [1, 1]} : vector<8x256xf32> to vector<8x128xf32>
    %c0_6 = arith.constant 0 : index
    %c0_7 = arith.constant 0 : index
    %c0_8 = arith.constant 0 : index
    %9 = vector.load %arg2[%c0_6, %c0_7, %c0_8] : memref<1x8x128xbf16, #tpu.memory_space<vmem>>, vector<1x8x128xbf16>
    %10 = vector.shape_cast %7 : vector<8x128xf32> to vector<1x8x128xf32>
    %11 = arith.truncf %10 : vector<1x8x128xf32> to vector<1x8x128xbf16>
    %cst_9 = arith.constant dense<0.000000e+00> : vector<1x8x8xf32>
    %12 = tpu.matmul %11, %9, %cst_9 {dimension_numbers = #tpu.dot_dimension_numbers<[2], [2], [1], [1], [0, 0, 0, 1, 1, 1], [0], [0]>} : vector<1x8x128xbf16>, vector<1x8x128xbf16>, vector<1x8x8xf32> -> vector<1x8x8xf32>
    %cst_10 = arith.constant 0.176776692 : f32
    %13 = vector.broadcast %cst_10 : f32 to vector<1x8x8xf32>
    %14 = arith.mulf %12, %13 : vector<1x8x8xf32>
    %cst_11 = arith.constant dense<0xFF800000> : vector<1x8xf32>
    %15 = vector.multi_reduction <maximumf>, %14, %cst_11 [2] : vector<1x8x8xf32> to vector<1x8xf32>
    %16 = vector.shape_cast %15 : vector<1x8xf32> to vector<1x8x1xf32>
    %17 = vector.broadcast %16 : vector<1x8x1xf32> to vector<1x8x8xf32>
    %18 = arith.subf %14, %17 : vector<1x8x8xf32>
    %19 = math.exp %18 : vector<1x8x8xf32>
    %cst_12 = arith.constant dense<0.000000e+00> : vector<1x8xf32>
    %20 = vector.multi_reduction <add>, %19, %cst_12 [2] : vector<1x8x8xf32> to vector<1x8xf32>
    %21 = vector.shape_cast %20 : vector<1x8xf32> to vector<1x8x1xf32>
    %22 = tpu.reciprocal %21 {approx = true} : vector<1x8x1xf32> -> vector<1x8x1xf32>
    %23 = vector.broadcast %22 : vector<1x8x1xf32> to vector<1x8x8xf32>
    %24 = arith.mulf %19, %23 : vector<1x8x8xf32>
    %25 = arith.truncf %24 : vector<1x8x8xf32> to vector<1x8x8xbf16>
    %cst_13 = arith.constant dense<0.000000e+00> : vector<1x8x128xf32>
    %26 = tpu.matmul %25, %9, %cst_13 {dimension_numbers = #tpu.dot_dimension_numbers<[2], [1], [1], [2], [0, 0, 0, 1, 1, 2], [0], [0]>} : vector<1x8x8xbf16>, vector<1x8x128xbf16>, vector<1x8x128xf32> -> vector<1x8x128xf32>
    %27 = vector.shape_cast %26 : vector<1x8x128xf32> to vector<8x128xf32>
    %28 = arith.truncf %27 : vector<8x128xf32> to vector<8x128xbf16>
    %c0_14 = arith.constant 0 : index
    %c0_15 = arith.constant 0 : index
    %29 = vector.load %arg5[%c0_14, %c0_15] : memref<128x128xbf16, #tpu.memory_space<vmem>>, vector<128x128xbf16>
    %cst_16 = arith.constant dense<0.000000e+00> : vector<8x128xf32>
    %30 = tpu.matmul %28, %29, %cst_16 {dimension_numbers = #tpu.dot_dimension_numbers<[1], [0], [0], [1], [0, 0, 1, 1], [], []>} : vector<8x128xbf16>, vector<128x128xbf16>, vector<8x128xf32> -> vector<8x128xf32>
    %31 = arith.addf %8, %30 : vector<8x128xf32>
    %c0_17 = arith.constant 0 : index
    %c0_18 = arith.constant 0 : index
    %32 = vector.load %arg6[%c0_17, %c0_18] : memref<1x128xf32, #tpu.memory_space<vmem>>, vector<1x128xf32>
    %33 = vector.broadcast %32 : vector<1x128xf32> to vector<8x128xf32>
    %34 = arith.addf %31, %33 : vector<8x128xf32>
    %35 = vector.shape_cast %34 : vector<8x128xf32> to vector<1x8x128xf32>
    %c0_19 = arith.constant 0 : index
    %c0_20 = arith.constant 0 : index
    %c0_21 = arith.constant 0 : index
    %36 = vector.load %arg7[%c0_19, %c0_20, %c0_21] : memref<1x8x128xf32, #tpu.memory_space<vmem>>, vector<1x8x128xf32>
    tpu.vector_store %arg7[%c0_19, %c0_20, %c0_21], %35 {strides = array<i32>} : memref<1x8x128xf32, #tpu.memory_space<vmem>>, vector<1x8x128xf32>,
    return
  }
  func.func @transform_0(%arg0: i32) -> (i32, i32, i32) {
    %c0_i32 = arith.constant 0 : i32
    %c0_i32_0 = arith.constant 0 : i32
    %c0_i32_1 = arith.constant 0 : i32
    return %arg0, %c0_i32, %c0_i32_0 : i32, i32, i32
  }
  func.func @transform_1(%arg0: i32) -> (i32, i32, i32) {
    %c0_i32 = arith.constant 0 : i32
    %c0_i32_0 = arith.constant 0 : i32
    %c0_i32_1 = arith.constant 0 : i32
    return %arg0, %c0_i32, %c0_i32_0 : i32, i32, i32
  }
  func.func @transform_2(%arg0: i32) -> (i32, i32) {
    %c0_i32 = arith.constant 0 : i32
    %c0_i32_0 = arith.constant 0 : i32
    %c0_i32_1 = arith.constant 0 : i32
    return %c0_i32, %c0_i32_0 : i32, i32
  }
  func.func @transform_3(%arg0: i32) -> (i32, i32) {
    %c0_i32 = arith.constant 0 : i32
    %c0_i32_0 = arith.constant 0 : i32
    %c0_i32_1 = arith.constant 0 : i32
    return %c0_i32, %c0_i32_0 : i32, i32
  }
  func.func @transform_4(%arg0: i32) -> (i32, i32) {
    %c0_i32 = arith.constant 0 : i32
    %c0_i32_0 = arith.constant 0 : i32
    %c0_i32_1 = arith.constant 0 : i32
    return %c0_i32, %c0_i32_0 : i32, i32
  }
  func.func @transform_5(%arg0: i32) -> (i32, i32) {
    %c0_i32 = arith.constant 0 : i32
    %c0_i32_0 = arith.constant 0 : i32
    %c0_i32_1 = arith.constant 0 : i32
    return %c0_i32, %c0_i32_0 : i32, i32
  }
  func.func @transform_6(%arg0: i32) -> (i32, i32, i32) {
    %c0_i32 = arith.constant 0 : i32
    %c0_i32_0 = arith.constant 0 : i32
    %c0_i32_1 = arith.constant 0 : i32
    return %arg0, %c0_i32, %c0_i32_0 : i32, i32, i32
  }
}

</mosaic_0001>

<llo_original>
// kernel: tpu_custom_call.1
$region0: #{tpu_custom_call.1}
  #allocation0 [shape = 'u32[]', space=smem, size = 0x4, offset = 0x4, fixed_abs, tag = 'smem constant byte address 0x4 - core index']
  #allocation1 [shape = 'u32[144,128]{1,0:T(1,128)}', space=vmem, size = 0x12000, scoped, tag = 'internal scratch']
  %s0 = inlined_call_operand.hbm [shape: bf16[2,8,128], index: 0, kind: input, shape index: {}]
  %s1 = inlined_call_operand.hbm [shape: bf16[2,8,128], index: 1, kind: input, shape index: {}]
  %s2 = inlined_call_operand.hbm [shape: bf16[128,256], index: 2, kind: input, shape index: {}]
  %s3 = inlined_call_operand.vmem [shape: f32[1,128], index: 3, kind: input, shape index: {}]
  %s4 = inlined_call_operand.hbm [shape: bf16[128,128], index: 4, kind: input, shape index: {}]
  %s5 = inlined_call_operand.vmem [shape: f32[1,128], index: 5, kind: input, shape index: {}]
  %s6 = inlined_call_operand.hbm [shape: f32[2,8,128], index: 6, kind: output, shape index: {}]
  %s7 = sld [smem:[#allocation0]]
  $region73: #{tpu_custom_call.1} parent=0
    _
  %s9 = ssub.s32 1, %s7
  %s10 = scalar_select 0, %s9, %s7
  $region1: #{tpu_custom_call.1} parent=0
    #allocation2 [shape = 'u8[4096]{0}', space=vmem, size = 0x1000, scoped, tag = 'input window, operand 0']
    #allocation3 [shape = 's32[2]{0}', space=sflag, size = 0x8, scoped, tag = 'scoped memory for tpu_custom_call.1']
    #allocation4 [shape = 's32[2]{0}', space=sflag, size = 0x8, scoped, tag = 'scoped memory for tpu_custom_call.1']
    #allocation5 [shape = 'u8[4096]{0}', space=vmem, size = 0x1000, scoped, tag = 'input window, operand 1']
    #allocation6 [shape = 's32[2]{0}', space=sflag, size = 0x8, scoped, tag = 'scoped memory for tpu_custom_call.1']
    #allocation7 [shape = 'u8[65536]{0}', space=vmem, size = 0x10000, scoped, tag = 'input window, operand 2, single buffered']
    #allocation8 [shape = 'u8[32768]{0}', space=vmem, size = 0x8000, scoped, tag = 'input window, operand 4, single buffered']
    #allocation9 [shape = 's32[1]{0}', space=sflag, size = 0x4, scoped, tag = 'scoped memory for tpu_custom_call.1']
    #allocation10 [shape = 'u8[8192]{0}', space=vmem, size = 0x2000, scoped, tag = 'output window, operand 0']
    %11 = vsyncpa [#allocation3], 0
    %s12 = scalar_lea.sflag [#allocation3], 1
    %13 = vsyncpa %s12, 0
    %14 = vsyncpa [#allocation6], 0
    %s15 = scalar_lea.sflag [#allocation6], 1
    %16 = vsyncpa %s15, 0
    %17 = vsyncpa [#allocation9], 0
    %18 = vsyncpa [#allocation4], 0
    %s19 = scalar_lea.sflag [#allocation4], 1
    %20 = vsyncpa %s19, 0
    loop: start=0, step=1, limit=4
    $region2: #{tpu_custom_call.1} parent=1 // loop_pre_header
      _
    $region3: #{tpu_custom_call.1} parent=1 // loop_header
      %s22 = sphi 0, %s26
      %p23 = scmp.ge.s32.totalorder %s22, 4
      %s32 = sphi 0, %s34
      %s35 = sphi 0, %s32
      %s36 = sphi 0, %s35
      %s52 = sphi 0, %s36
      %s58 = sphi 0, %s60
      %s61 = sphi 0, %s58
      %s62 = sphi 0, %s61
      %s78 = sphi 0, %s62
      %s82 = sphi 0, %s82
      %s84 = sphi 0, %s82
      %s85 = sphi 0, %s84
      %s99 = sphi 0, %s85
      %s103 = sphi 0, %s103
      %s105 = sphi 0, %s103
      %s106 = sphi 0, %s105
      %s120 = sphi 0, %s106
      %s124 = sphi 0, %s124
      %s126 = sphi 0, %s124
      %s127 = sphi 0, %s126
      %s141 = sphi 0, %s127
      %s145 = sphi 0, %s145
      %s147 = sphi 0, %s145
      %s148 = sphi 0, %s147
      %s162 = sphi 0, %s148
      %s168 = sphi 0, %s170
      %s171 = sphi 0, %s168
      %s172 = sphi 0, %s171
      %s188 = sphi 0, %s172
    $region4: #{tpu_custom_call.1} parent=1 // loop_header_branch
      %25 = sbr.rel (%p23) target = $region8
    $region5: #{tpu_custom_call.1} parent=1 // loop_body
      %s27 = ssub.s32 %s22, 1
      %s28 = ssub.s32 %s22, 2
      %s29 = sadd.s32 %s22, 1
      %s30 = ssub.s32 %s22, %s29
      %p31 = scmp.eq.s32.totalorder %s30, 0
      %s33 = sadd.s32 %s32, 1
      %s34 = scalar_select %p31, %s32, %s33
      %p37 = pneg %p31
      %p38 = scmp.eq.s32.totalorder %s22, 1
      %p39 = por %p37, %p38
      %p40 = scmp.ne.s32.totalorder %s32, %s35
      %p41 = scmp.eq.s32.totalorder %s22, 0
      %p42 = por %p40, %p41
      %p43 = scmp.ne.s32.totalorder %s32, %s35
      %p44 = scmp.eq.s32.totalorder %s27, 1
      %p45 = por %p43, %p44
      %p46 = scmp.ne.s32.totalorder %s35, %s36
      %p47 = scmp.eq.s32.totalorder %s27, 0
      %p48 = por %p46, %p47
      %p49 = scmp.ne.s32.totalorder %s35, %s36
      %p50 = scmp.eq.s32.totalorder %s28, 1
      %p51 = por %p49, %p50
      %p53 = scmp.ne.s32.totalorder %s36, %s52
      %p54 = scmp.eq.s32.totalorder %s28, 0
      %p55 = por %p53, %p54
      %s56 = ssub.s32 %s22, %s29
      %p57 = scmp.eq.s32.totalorder %s56, 0
      %s59 = sadd.s32 %s58, 1
      %s60 = scalar_select %p57, %s58, %s59
      %p63 = pneg %p57
      %p64 = scmp.eq.s32.totalorder %s22, 1
      %p65 = por %p63, %p64
      %p66 = scmp.ne.s32.totalorder %s58, %s61
      %p67 = scmp.eq.s32.totalorder %s22, 0
      %p68 = por %p66, %p67
      %p69 = scmp.ne.s32.totalorder %s58, %s61
      %p70 = scmp.eq.s32.totalorder %s27, 1
      %p71 = por %p69, %p70
      %p72 = scmp.ne.s32.totalorder %s61, %s62
      %p73 = scmp.eq.s32.totalorder %s27, 0
      %p74 = por %p72, %p73
      %p75 = scmp.ne.s32.totalorder %s61, %s62
      %p76 = scmp.eq.s32.totalorder %s28, 1
      %p77 = por %p75, %p76
      %p79 = scmp.ne.s32.totalorder %s62, %s78
      %p80 = scmp.eq.s32.totalorder %s28, 0
      %p81 = por %p79, %p80
      %s83 = sadd.s32 %s82, 1
      %p86 = scmp.eq.s32.totalorder %s22, 1
      %p87 = scmp.ne.s32.totalorder %s82, %s84
      %p88 = scmp.eq.s32.totalorder %s22, 0
      %p89 = por %p87, %p88
      %p90 = scmp.ne.s32.totalorder %s82, %s84
      %p91 = scmp.eq.s32.totalorder %s27, 1
      %p92 = por %p90, %p91
      %p93 = scmp.ne.s32.totalorder %s84, %s85
      %p94 = scmp.eq.s32.totalorder %s27, 0
      %p95 = por %p93, %p94
      %p96 = scmp.ne.s32.totalorder %s84, %s85
      %p97 = scmp.eq.s32.totalorder %s28, 1
      %p98 = por %p96, %p97
      %p100 = scmp.ne.s32.totalorder %s85, %s99
      %p101 = scmp.eq.s32.totalorder %s28, 0
      %p102 = por %p100, %p101
      %s104 = sadd.s32 %s103, 1
      %p107 = scmp.eq.s32.totalorder %s22, 1
      %p108 = scmp.ne.s32.totalorder %s103, %s105
      %p109 = scmp.eq.s32.totalorder %s22, 0
      %p110 = por %p108, %p109
      %p111 = scmp.ne.s32.totalorder %s103, %s105
      %p112 = scmp.eq.s32.totalorder %s27, 1
      %p113 = por %p111, %p112
      %p114 = scmp.ne.s32.totalorder %s105, %s106
      %p115 = scmp.eq.s32.totalorder %s27, 0
      %p116 = por %p114, %p115
      %p117 = scmp.ne.s32.totalorder %s105, %s106
      %p118 = scmp.eq.s32.totalorder %s28, 1
      %p119 = por %p117, %p118
      %p121 = scmp.ne.s32.totalorder %s106, %s120
      %p122 = scmp.eq.s32.totalorder %s28, 0
      %p123 = por %p121, %p122
      %s125 = sadd.s32 %s124, 1
      %p128 = scmp.eq.s32.totalorder %s22, 1
      %p129 = scmp.ne.s32.totalorder %s124, %s126
      %p130 = scmp.eq.s32.totalorder %s22, 0
      %p131 = por %p129, %p130
      %p132 = scmp.ne.s32.totalorder %s124, %s126
      %p133 = scmp.eq.s32.totalorder %s27, 1
      %p134 = por %p132, %p133
      %p135 = scmp.ne.s32.totalorder %s126, %s127
      %p136 = scmp.eq.s32.totalorder %s27, 0
      %p137 = por %p135, %p136
      %p138 = scmp.ne.s32.totalorder %s126, %s127
      %p139 = scmp.eq.s32.totalorder %s28, 1
      %p140 = por %p138, %p139
      %p142 = scmp.ne.s32.totalorder %s127, %s141
      %p143 = scmp.eq.s32.totalorder %s28, 0
      %p144 = por %p142, %p143
      %s146 = sadd.s32 %s145, 1
      %p149 = scmp.eq.s32.totalorder %s22, 1
      %p150 = scmp.ne.s32.totalorder %s145, %s147
      %p151 = scmp.eq.s32.totalorder %s22, 0
      %p152 = por %p150, %p151
      %p153 = scmp.ne.s32.totalorder %s145, %s147
      %p154 = scmp.eq.s32.totalorder %s27, 1
      %p155 = por %p153, %p154
      %p156 = scmp.ne.s32.totalorder %s147, %s148
      %p157 = scmp.eq.s32.totalorder %s27, 0
      %p158 = por %p156, %p157
      %p159 = scmp.ne.s32.totalorder %s147, %s148
      %p160 = scmp.eq.s32.totalorder %s28, 1
      %p161 = por %p159, %p160
      %p163 = scmp.ne.s32.totalorder %s148, %s162
      %p164 = scmp.eq.s32.totalorder %s28, 0
      %p165 = por %p163, %p164
      %s166 = ssub.s32 %s22, %s29
      %p167 = scmp.eq.s32.totalorder %s166, 0
      %s169 = sadd.s32 %s168, 1
      %s170 = scalar_select %p167, %s168, %s169
      %p173 = pneg %p167
      %p174 = scmp.eq.s32.totalorder %s22, 1
      %p175 = por %p173, %p174
      %p176 = scmp.ne.s32.totalorder %s168, %s171
      %p177 = scmp.eq.s32.totalorder %s22, 0
      %p178 = por %p176, %p177
      %p179 = scmp.ne.s32.totalorder %s168, %s171
      %p180 = scmp.eq.s32.totalorder %s27, 1
      %p181 = por %p179, %p180
      %p182 = scmp.ne.s32.totalorder %s171, %s172
      %p183 = scmp.eq.s32.totalorder %s27, 0
      %p184 = por %p182, %p183
      %p185 = scmp.ne.s32.totalorder %s171, %s172
      %p186 = scmp.eq.s32.totalorder %s28, 1
      %p187 = por %p185, %p186
      %p189 = scmp.ne.s32.totalorder %s172, %s188
      %p190 = scmp.eq.s32.totalorder %s28, 0
      %p191 = por %p189, %p190
      %p192 = scmp.le.s32.totalorder 1, %s22
      %p193 = scmp.lt.s32.totalorder %s22, 3
      %p194 = pnand %p192, %p193
      %p195 = pneg %p194
      // Predicated region
      $region9: #{tpu_custom_call.1} parent=5 // pred_check
        _
      $region10: #{tpu_custom_call.1} parent=5 // pred_check_branch
        %197 = sbr.rel (%p194) target = $region12
      $region11: #{tpu_custom_call.1} parent=5 // pred_region
        %s198 = ssub.s32 %s22, 1
        // Predicated region
        $region13: #{tpu_custom_call.1} parent=11 // pred_check
          %p199 = pneg %p95
        $region14: #{tpu_custom_call.1} parent=11 // pred_check_branch
          %201 = sbr.rel (%p199) target = $region16
        $region15: #{tpu_custom_call.1} parent=11 // pred_region
          %s203 = ssub.s32 2048, 2048
          %204 = vsyncadd [#allocation6], %s203
          %s205 = sshll.u32 [#allocation7], 4
          %s206 = int_to_ptr.vmem [resolvable:$true] %s205
          %211 = dma.hbm_to_vmem [thread:$0]  %s2, 2048, %s206, [#allocation6], 128, 128, 8
        $region16: #{tpu_custom_call.1} parent=11 // pred_fallthru
          _
        // Predicated region
        $region17: #{tpu_custom_call.1} parent=11 // pred_check
          %p212 = pneg %p116
        $region18: #{tpu_custom_call.1} parent=11 // pred_check_branch
          %214 = sbr.rel (%p212) target = $region20
        $region19: #{tpu_custom_call.1} parent=11 // pred_region
          _
        $region20: #{tpu_custom_call.1} parent=11 // pred_fallthru
          _
        // Predicated region
        $region21: #{tpu_custom_call.1} parent=11 // pred_check
          %p215 = pneg %p137
        $region22: #{tpu_custom_call.1} parent=11 // pred_check_branch
          %217 = sbr.rel (%p215) target = $region24
        $region23: #{tpu_custom_call.1} parent=11 // pred_region
          %s219 = ssub.s32 1024, 1024
          %220 = vsyncadd [#allocation9], %s219
          %s221 = sshll.u32 [#allocation8], 4
          %s222 = int_to_ptr.vmem [resolvable:$true] %s221
          %227 = dma.hbm_to_vmem [thread:$0]  %s4, 1024, %s222, [#allocation9], 64, 64, 4
        $region24: #{tpu_custom_call.1} parent=11 // pred_fallthru
          _
        // Predicated region
        $region25: #{tpu_custom_call.1} parent=11 // pred_check
          %p228 = pneg %p158
        $region26: #{tpu_custom_call.1} parent=11 // pred_check_branch
          %230 = sbr.rel (%p228) target = $region28
        $region27: #{tpu_custom_call.1} parent=11 // pred_region
          _
        $region28: #{tpu_custom_call.1} parent=11 // pred_fallthru
          _
      $region12: #{tpu_custom_call.1} parent=5 // pred_fallthru
        _
      %p231 = scmp.lt.s32.totalorder %s22, 2
      // Predicated region
      $region29: #{tpu_custom_call.1} parent=5 // pred_check
        %p232 = pneg %p231
      $region30: #{tpu_custom_call.1} parent=5 // pred_check_branch
        %234 = sbr.rel (%p232) target = $region32
      $region31: #{tpu_custom_call.1} parent=5 // pred_region
        // Predicated region
        $region33: #{tpu_custom_call.1} parent=31 // pred_check
          %p235 = pneg %p42
        $region34: #{tpu_custom_call.1} parent=31 // pred_check_branch
          %237 = sbr.rel (%p235) target = $region36
        $region35: #{tpu_custom_call.1} parent=31 // pred_region
          %s238 = sand.u32 %s32, 1
          %s239 = scalar_lea.sflag [#allocation3], %s238
          %s240 = sand.u32 %s32, 1
          %s241 = smul.addr %s240, 4
          %s242 = scalar_lea.vmem [#allocation2], %s241
          %s244 = ssub.s32 64, 64
          %245 = vsyncadd %s239, %s244
          %s246 = smul.addr %s22, 64
          %s247 = scalar_lea.hbm %s0, %s246
          %s249 = sshll.u32 %s242, 4
          %s250 = int_to_ptr.vmem [resolvable:$true] %s249
          %252 = dma.hbm_to_vmem [thread:$0]  %s247, 64, %s250, %s239
        $region36: #{tpu_custom_call.1} parent=31 // pred_fallthru
          _
        // Predicated region
        $region37: #{tpu_custom_call.1} parent=31 // pred_check
          %p253 = pneg %p68
        $region38: #{tpu_custom_call.1} parent=31 // pred_check_branch
          %255 = sbr.rel (%p253) target = $region40
        $region39: #{tpu_custom_call.1} parent=31 // pred_region
          %s256 = sand.u32 %s22, 1
          %s257 = scalar_lea.sflag [#allocation6], %s256
          %s258 = sand.u32 %s58, 1
          %s259 = smul.addr %s258, 4
          %s260 = scalar_lea.vmem [#allocation5], %s259
          %s262 = ssub.s32 64, 64
          %263 = vsyncadd %s257, %s262
          %s264 = smul.addr %s22, 64
          %s265 = scalar_lea.hbm %s1, %s264
          %s267 = sshll.u32 %s260, 4
          %s268 = int_to_ptr.vmem [resolvable:$true] %s267
          %270 = dma.hbm_to_vmem [thread:$0]  %s265, 64, %s268, %s257
        $region40: #{tpu_custom_call.1} parent=31 // pred_fallthru
          _
      $region32: #{tpu_custom_call.1} parent=5 // pred_fallthru
        _
      %p271 = scmp.le.s32.totalorder 1, %s22
      %p272 = scmp.lt.s32.totalorder %s22, 3
      %p273 = pnand %p271, %p272
      %p274 = pneg %p273
      // Predicated region
      $region41: #{tpu_custom_call.1} parent=5 // pred_check
        _
      $region42: #{tpu_custom_call.1} parent=5 // pred_check_branch
        %276 = sbr.rel (%p273) target = $region44
      $region43: #{tpu_custom_call.1} parent=5 // pred_region
        %s277 = ssub.s32 %s22, 1
        %s278 = sand.u32 %s35, 1
        %s279 = scalar_lea.sflag [#allocation3], %s278
        %s280 = sand.u32 %s35, 1
        %s281 = smul.addr %s280, 4
        %s282 = scalar_lea.vmem [#allocation2], %s281
        // Predicated region
        $region45: #{tpu_custom_call.1} parent=43 // pred_check
          %p283 = pneg %p48
        $region46: #{tpu_custom_call.1} parent=43 // pred_check_branch
          %285 = sbr.rel (%p283) target = $region48
        $region47: #{tpu_custom_call.1} parent=43 // pred_region
          %286 = dma.done %s279, 64
        $region48: #{tpu_custom_call.1} parent=43 // pred_fallthru
          _
        %s287 = sand.u32 %s27, 1
        %s288 = scalar_lea.sflag [#allocation6], %s287
        %s289 = sand.u32 %s61, 1
        %s290 = smul.addr %s289, 4
        %s291 = scalar_lea.vmem [#allocation5], %s290
        // Predicated region
        $region49: #{tpu_custom_call.1} parent=43 // pred_check
          %p292 = pneg %p74
        $region50: #{tpu_custom_call.1} parent=43 // pred_check_branch
          %294 = sbr.rel (%p292) target = $region52
        $region51: #{tpu_custom_call.1} parent=43 // pred_region
          %295 = dma.done %s288, 64
        $region52: #{tpu_custom_call.1} parent=43 // pred_fallthru
          _
        // Predicated region
        $region53: #{tpu_custom_call.1} parent=43 // pred_check
          %p296 = pneg %p95
        $region54: #{tpu_custom_call.1} parent=43 // pred_check_branch
          %298 = sbr.rel (%p296) target = $region56
        $region55: #{tpu_custom_call.1} parent=43 // pred_region
          %299 = dma.done [#allocation6], 2048
        $region56: #{tpu_custom_call.1} parent=43 // pred_fallthru
          _
        // Predicated region
        $region57: #{tpu_custom_call.1} parent=43 // pred_check
          %p300 = pneg %p137
        $region58: #{tpu_custom_call.1} parent=43 // pred_check_branch
          %302 = sbr.rel (%p300) target = $region60
        $region59: #{tpu_custom_call.1} parent=43 // pred_region
          %303 = dma.done [#allocation9], 1024
        $region60: #{tpu_custom_call.1} parent=43 // pred_fallthru
          _
        %s304 = sand.u32 %s35, 1
        %s305 = scalar_lea.sflag [#allocation3], %s304
        %s306 = sand.u32 %s35, 1
        %s307 = smul.addr %s306, 4
        %s308 = scalar_lea.vmem [#allocation2], %s307
        %p309 = pneg %p48
        %p310 = pneg %p45
        %s311 = sand.u32 %s27, 1
        %s312 = scalar_lea.sflag [#allocation6], %s311
        %s313 = sand.u32 %s61, 1
        %s314 = smul.addr %s313, 4
        %s315 = scalar_lea.vmem [#allocation5], %s314
        %p316 = pneg %p74
        %p317 = pneg %p71
        %p318 = pneg %p95
        %p319 = pneg %p92
        %p320 = pneg %p116
        %p321 = pneg %p113
        %p322 = pneg %p137
        %p323 = pneg %p134
        %p324 = pneg %p158
        %p325 = pneg %p155
        %p326 = pneg %p184
        %p327 = pneg %p181
        %s328 = sand.u32 %s171, 1
        %s329 = scalar_lea.sflag [#allocation4], %s328
        %s330 = sand.u32 %s171, 1
        %s331 = smul.addr %s330, 8
        %s332 = scalar_lea.vmem [#allocation10], %s331
        %v334 = vld [vmem:[%s282] sm:$0xf]
        %v335 = vld [vmem:[#allocation7] sm:$0xff]
        %v336 = vld [vmem:[#allocation7 + $0x8] sm:$0xff]
        %v337 = vld [vmem:[#allocation7 + $0x10] sm:$0xff]
        %v338 = vld [vmem:[#allocation7 + $0x18] sm:$0xff]
        %v339 = vld [vmem:[#allocation7 + $0x20] sm:$0xff]
        %v340 = vld [vmem:[#allocation7 + $0x28] sm:$0xff]
        %v341 = vld [vmem:[#allocation7 + $0x30] sm:$0xff]
        %v342 = vld [vmem:[#allocation7 + $0x38] sm:$0xff]
        %v343 = vld [vmem:[#allocation7 + $0x40] sm:$0xff]
        %v344 = vld [vmem:[#allocation7 + $0x48] sm:$0xff]
        %v345 = vld [vmem:[#allocation7 + $0x50] sm:$0xff]
        %v346 = vld [vmem:[#allocation7 + $0x58] sm:$0xff]
        %v347 = vld [vmem:[#allocation7 + $0x60] sm:$0xff]
        %v348 = vld [vmem:[#allocation7 + $0x68] sm:$0xff]
        %v349 = vld [vmem:[#allocation7 + $0x70] sm:$0xff]
        %v350 = vld [vmem:[#allocation7 + $0x78] sm:$0xff]
        %v367 = vunpack.c.l.b16 %v335
        %v368 = vunpack.c.h.b16 %v335
        %v369 = vunpack.c.l.b16 %v336
        %v370 = vunpack.c.h.b16 %v336
        %v371 = vunpack.c.l.b16 %v337
        %v372 = vunpack.c.h.b16 %v337
        %v373 = vunpack.c.l.b16 %v338
        %v374 = vunpack.c.h.b16 %v338
        %v375 = vunpack.c.l.b16 %v339
        %v376 = vunpack.c.h.b16 %v339
        %v377 = vunpack.c.l.b16 %v340
        %v378 = vunpack.c.h.b16 %v340
        %v379 = vunpack.c.l.b16 %v341
        %v380 = vunpack.c.h.b16 %v341
        %v381 = vunpack.c.l.b16 %v342
        %v382 = vunpack.c.h.b16 %v342
        %v383 = vunpack.c.l.b16 %v343
        %v384 = vunpack.c.h.b16 %v343
        %v385 = vunpack.c.l.b16 %v344
        %v386 = vunpack.c.h.b16 %v344
        %v387 = vunpack.c.l.b16 %v345
        %v388 = vunpack.c.h.b16 %v345
        %v389 = vunpack.c.l.b16 %v346
        %v390 = vunpack.c.h.b16 %v346
        %v391 = vunpack.c.l.b16 %v347
        %v392 = vunpack.c.h.b16 %v347
        %v393 = vunpack.c.l.b16 %v348
        %v394 = vunpack.c.h.b16 %v348
        %v395 = vunpack.c.l.b16 %v349
        %v396 = vunpack.c.h.b16 %v349
        %v397 = vunpack.c.l.b16 %v350
        %v398 = vunpack.c.h.b16 %v350
        %v399 = vpack.c.b16 %v369, %v367
        %v400 = vpack.c.b16 %v370, %v368
        %v401 = vpack.c.b16 %v373, %v371
        %v402 = vpack.c.b16 %v374, %v372
        %v403 = vpack.c.b16 %v377, %v375
        %v404 = vpack.c.b16 %v378, %v376
        %v405 = vpack.c.b16 %v381, %v379
        %v406 = vpack.c.b16 %v382, %v380
        %v407 = vpack.c.b16 %v385, %v383
        %v408 = vpack.c.b16 %v386, %v384
        %v409 = vpack.c.b16 %v389, %v387
        %v410 = vpack.c.b16 %v390, %v388
        %v411 = vpack.c.b16 %v393, %v391
        %v412 = vpack.c.b16 %v394, %v392
        %v413 = vpack.c.b16 %v397, %v395
        %v414 = vpack.c.b16 %v398, %v396
        %431 = vmatprep.subr.bf16.mxu0 %v400
        %432 = vmatpush1.bf16.msra.mxu0 %v399
        %433 = vmatprep.subr.bf16.mxu0 %v402
        %434 = vmatpush1.bf16.msra.mxu0 %v401
        %435 = vmatprep.subr.bf16.mxu0 %v404
        %436 = vmatpush1.bf16.msra.mxu0 %v403
        %437 = vmatprep.subr.bf16.mxu0 %v406
        %438 = vmatpush1.bf16.msra.mxu0 %v405
        %439 = vmatprep.subr.bf16.mxu0 %v408
        %440 = vmatpush1.bf16.msra.mxu0 %v407
        %441 = vmatprep.subr.bf16.mxu0 %v410
        %442 = vmatpush1.bf16.msra.mxu0 %v409
        %443 = vmatprep.subr.bf16.mxu0 %v412
        %444 = vmatpush1.bf16.msra.mxu0 %v411
        %445 = vmatprep.subr.bf16.mxu0 %v414
        %446 = vmatpush1.bf16.msra.mxu0 %v413
        %447 = vmatprep.subr.bf16.mxu0 0
        %448 = vmatpush1.bf16.msra.mxu0 0
        %449 = vmatprep.subr.bf16.mxu0 0
        %450 = vmatpush1.bf16.msra.mxu0 0
        %451 = vmatprep.subr.bf16.mxu0 0
        %452 = vmatpush1.bf16.msra.mxu0 0
        %453 = vmatprep.subr.bf16.mxu0 0
        %454 = vmatpush1.bf16.msra.mxu0 0
        %455 = vmatprep.subr.bf16.mxu0 0
        %456 = vmatpush1.bf16.msra.mxu0 0
        %457 = vmatprep.subr.bf16.mxu0 0
        %458 = vmatpush1.bf16.msra.mxu0 0
        %459 = vmatprep.subr.bf16.mxu0 0
        %460 = vmatpush1.bf16.msra.mxu0 0
        %461 = vmatprep.subr.bf16.mxu0 0
        %462 = vmatpush1.bf16.msra.mxu0 0
        %463 = vmatprep.mubr.bf16.mxu0 0
        %464 = vmatmul.mubr.bf16.gmra.mrb[0].mxu0 %v334
        %v465 = vpop.f32.mrb[0].mxu0
        %v466 = vadd.f32 0.0, %v465
        %v467 = vpop.f32.mrb[0].mxu0
        %v468 = vadd.f32 0.0, %v467
        %v469 = vpop.f32.mrb[0].mxu0
        %v470 = vpop.f32.mrb[0].mxu0
        %471 = vdwg.mxu0
        %v472 = vld [vmem:[%s3] sm:$0x1]
        %v474 = vlaneseq
        %v475 = vshrl.u32 %v474, 7
        %v476 = vsub.s32 0, %v475
        %v477 = vrot.slane %v472, %v476
        %v479 = vadd.f32 %v466, %v477
        %v480 = vld [vmem:[%s291] sm:$0xf]
        %v481 = vpack.c.bf16 %v479, %v479
        %482 = vmatprep.subr.bf16.mxu0 0
        %483 = vmatpush1.bf16.xpose.msra.mxu0 %v480
        %484 = vmatprep.subr.bf16.mxu0 0
        %485 = vmatpush1.bf16.xpose.msra.mxu0 0
        %486 = vmatprep.subr.bf16.mxu0 0
        %487 = vmatpush1.bf16.xpose.msra.mxu0 0
        %488 = vmatprep.subr.bf16.mxu0 0
        %489 = vmatpush1.bf16.xpose.msra.mxu0 0
        %490 = vmatprep.subr.bf16.mxu0 0
        %491 = vmatpush1.bf16.xpose.msra.mxu0 0
        %492 = vmatprep.subr.bf16.mxu0 0
        %493 = vmatpush1.bf16.xpose.msra.mxu0 0
        %494 = vmatprep.subr.bf16.mxu0 0
        %495 = vmatpush1.bf16.xpose.msra.mxu0 0
        %496 = vmatprep.subr.bf16.mxu0 0
        %497 = vmatpush1.bf16.xpose.msra.mxu0 0
        %498 = vmatprep.subr.bf16.mxu0 0
        %499 = vmatpush1.bf16.xpose.msra.mxu0 0
        %500 = vmatprep.subr.bf16.mxu0 0
        %501 = vmatpush1.bf16.xpose.msra.mxu0 0
        %502 = vmatprep.subr.bf16.mxu0 0
        %503 = vmatpush1.bf16.xpose.msra.mxu0 0
        %504 = vmatprep.subr.bf16.mxu0 0
        %505 = vmatpush1.bf16.xpose.msra.mxu0 0
        %506 = vmatprep.subr.bf16.mxu0 0
        %507 = vmatpush1.bf16.xpose.msra.mxu0 0
        %508 = vmatprep.subr.bf16.mxu0 0
        %509 = vmatpush1.bf16.xpose.msra.mxu0 0
        %510 = vmatprep.subr.bf16.mxu0 0
        %511 = vmatpush1.bf16.xpose.msra.mxu0 0
        %512 = vmatprep.subr.bf16.mxu0 0
        %513 = vmatpush1.bf16.xpose.msra.mxu0 0
        %514 = vmatprep.mubr.bf16.mxu0 0
        %515 = vmatmul.mubr.bf16.gmra.mrb[0].mxu0 %v481
        %v516 = vpop.f32.mrb[0].mxu0
        %v517 = vadd.f32 0.0, %v516
        %v518 = vpop.f32.mrb[0].mxu0
        %v519 = vpop.f32.mrb[0].mxu0
        %v520 = vpop.f32.mrb[0].mxu0
        %521 = vdwg.mxu0
        %v522 = vmul.f32 %v517, 0.17677669
        %vm523 = vcmask 64512
        %v524 = vsel %vm523, %v522, -inf
        %525 = vmax.xlane.f32.xlu0 %v524
        %v526 = vpop.xlane.xlu0 %525
        %v527 = vsub.f32 %v522, %v526
        %v528 = vmul.f32 %v527, 1.442695
        %v529 = vpow.pop %v528
        %v530 = vsel %vm523, %v529, 0.0
        %531 = vadd.xlane.f32.xlu0 %v530
        %v532 = vpop.xlane.xlu0 %531
        %v533 = vrcp.pop %v532
        %v534 = vmul.f32 %v529, %v533
        %v535 = vpack.c.bf16 %v534, %v534
        %v537 = vsel %vm523, %v535, 0
        %vm539 = vcmask 1043456
        %v541 = vsel %vm539, %v480, 0
        %543 = vmatprep.subr.bf16.mxu0 0
        %544 = vmatpush1.bf16.msra.mxu0 %v541
        %545 = vmatprep.subr.bf16.mxu0 0
        %546 = vmatpush1.bf16.msra.mxu0 0
        %547 = vmatprep.subr.bf16.mxu0 0
        %548 = vmatpush1.bf16.msra.mxu0 0
        %549 = vmatprep.subr.bf16.mxu0 0
        %550 = vmatpush1.bf16.msra.mxu0 0
        %551 = vmatprep.subr.bf16.mxu0 0
        %552 = vmatpush1.bf16.msra.mxu0 0
        %553 = vmatprep.subr.bf16.mxu0 0
        %554 = vmatpush1.bf16.msra.mxu0 0
        %555 = vmatprep.subr.bf16.mxu0 0
        %556 = vmatpush1.bf16.msra.mxu0 0
        %557 = vmatprep.subr.bf16.mxu0 0
        %558 = vmatpush1.bf16.msra.mxu0 0
        %559 = vmatprep.subr.bf16.mxu0 0
        %560 = vmatpush1.bf16.msra.mxu0 0
        %561 = vmatprep.subr.bf16.mxu0 0
        %562 = vmatpush1.bf16.msra.mxu0 0
        %563 = vmatprep.subr.bf16.mxu0 0
        %564 = vmatpush1.bf16.msra.mxu0 0
        %565 = vmatprep.subr.bf16.mxu0 0
        %566 = vmatpush1.bf16.msra.mxu0 0
        %567 = vmatprep.subr.bf16.mxu0 0
        %568 = vmatpush1.bf16.msra.mxu0 0
        %569 = vmatprep.subr.bf16.mxu0 0
        %570 = vmatpush1.bf16.msra.mxu0 0
        %571 = vmatprep.subr.bf16.mxu0 0
        %572 = vmatpush1.bf16.msra.mxu0 0
        %573 = vmatprep.subr.bf16.mxu0 0
        %574 = vmatpush1.bf16.msra.mxu0 0
        %575 = vmatprep.mubr.bf16.mxu0 0
        %576 = vmatmul.mubr.bf16.gmra.mrb[0].mxu0 %v537
        %v577 = vpop.f32.mrb[0].mxu0
        %v578 = vadd.f32 0.0, %v577
        %v579 = vpop.f32.mrb[0].mxu0
        %v580 = vpop.f32.mrb[0].mxu0
        %v581 = vpop.f32.mrb[0].mxu0
        %582 = vdwg.mxu0
        %v583 = vpack.c.bf16 %v578, %v578
        %v584 = vld [vmem:[#allocation8] sm:$0xf]
        %v585 = vld [vmem:[#allocation8 + $0x4] sm:$0xf]
        %v586 = vld [vmem:[#allocation8 + $0x8] sm:$0xf]
        %v587 = vld [vmem:[#allocation8 + $0xc] sm:$0xf]
        %v588 = vld [vmem:[#allocation8 + $0x10] sm:$0xf]
        %v589 = vld [vmem:[#allocation8 + $0x14] sm:$0xf]
        %v590 = vld [vmem:[#allocation8 + $0x18] sm:$0xf]
        %v591 = vld [vmem:[#allocation8 + $0x1c] sm:$0xf]
        %v592 = vld [vmem:[#allocation8 + $0x20] sm:$0xf]
        %v593 = vld [vmem:[#allocation8 + $0x24] sm:$0xf]
        %v594 = vld [vmem:[#allocation8 + $0x28] sm:$0xf]
        %v595 = vld [vmem:[#allocation8 + $0x2c] sm:$0xf]
        %v596 = vld [vmem:[#allocation8 + $0x30] sm:$0xf]
        %v597 = vld [vmem:[#allocation8 + $0x34] sm:$0xf]
        %v598 = vld [vmem:[#allocation8 + $0x38] sm:$0xf]
        %v599 = vld [vmem:[#allocation8 + $0x3c] sm:$0xf]
        %v616 = vunpack.c.l.b16 %v584
        %v617 = vunpack.c.l.b16 %v585
        %v618 = vunpack.c.l.b16 %v586
        %v619 = vunpack.c.l.b16 %v587
        %v620 = vunpack.c.l.b16 %v588
        %v621 = vunpack.c.l.b16 %v589
        %v622 = vunpack.c.l.b16 %v590
        %v623 = vunpack.c.l.b16 %v591
        %v624 = vunpack.c.l.b16 %v592
        %v625 = vunpack.c.l.b16 %v593
        %v626 = vunpack.c.l.b16 %v594
        %v627 = vunpack.c.l.b16 %v595
        %v628 = vunpack.c.l.b16 %v596
        %v629 = vunpack.c.l.b16 %v597
        %v630 = vunpack.c.l.b16 %v598
        %v631 = vunpack.c.l.b16 %v599
        %v632 = vpack.c.b16 %v617, %v616
        %v633 = vpack.c.b16 %v619, %v618
        %v634 = vpack.c.b16 %v621, %v620
        %v635 = vpack.c.b16 %v623, %v622
        %v636 = vpack.c.b16 %v625, %v624
        %v637 = vpack.c.b16 %v627, %v626
        %v638 = vpack.c.b16 %v629, %v628
        %v639 = vpack.c.b16 %v631, %v630
        %648 = vmatprep.subr.bf16.mxu0 0
        %649 = vmatpush1.bf16.msra.mxu0 %v632
        %650 = vmatprep.subr.bf16.mxu0 0
        %651 = vmatpush1.bf16.msra.mxu0 %v633
        %652 = vmatprep.subr.bf16.mxu0 0
        %653 = vmatpush1.bf16.msra.mxu0 %v634
        %654 = vmatprep.subr.bf16.mxu0 0
        %655 = vmatpush1.bf16.msra.mxu0 %v635
        %656 = vmatprep.subr.bf16.mxu0 0
        %657 = vmatpush1.bf16.msra.mxu0 %v636
        %658 = vmatprep.subr.bf16.mxu0 0
        %659 = vmatpush1.bf16.msra.mxu0 %v637
        %660 = vmatprep.subr.bf16.mxu0 0
        %661 = vmatpush1.bf16.msra.mxu0 %v638
        %662 = vmatprep.subr.bf16.mxu0 0
        %663 = vmatpush1.bf16.msra.mxu0 %v639
        %664 = vmatprep.subr.bf16.mxu0 0
        %665 = vmatpush1.bf16.msra.mxu0 0
        %666 = vmatprep.subr.bf16.mxu0 0
        %667 = vmatpush1.bf16.msra.mxu0 0
        %668 = vmatprep.subr.bf16.mxu0 0
        %669 = vmatpush1.bf16.msra.mxu0 0
        %670 = vmatprep.subr.bf16.mxu0 0
        %671 = vmatpush1.bf16.msra.mxu0 0
        %672 = vmatprep.subr.bf16.mxu0 0
        %673 = vmatpush1.bf16.msra.mxu0 0
        %674 = vmatprep.subr.bf16.mxu0 0
        %675 = vmatpush1.bf16.msra.mxu0 0
        %676 = vmatprep.subr.bf16.mxu0 0
        %677 = vmatpush1.bf16.msra.mxu0 0
        %678 = vmatprep.subr.bf16.mxu0 0
        %679 = vmatpush1.bf16.msra.mxu0 0
        %680 = vmatprep.mubr.bf16.mxu0 0
        %681 = vmatmul.mubr.bf16.gmra.mrb[0].mxu0 %v583
        %v682 = vpop.f32.mrb[0].mxu0
        %v683 = vadd.f32 0.0, %v682
        %v684 = vpop.f32.mrb[0].mxu0
        %v685 = vpop.f32.mrb[0].mxu0
        %v686 = vpop.f32.mrb[0].mxu0
        %687 = vdwg.mxu0
        %v688 = vadd.f32 %v468, %v683
        %v689 = vld [vmem:[%s5] sm:$0x1]
        %v691 = vlaneseq
        %v692 = vshrl.u32 %v691, 7
        %v693 = vsub.s32 0, %v692
        %v694 = vrot.slane %v689, %v693
        %v696 = vadd.f32 %v688, %v694
        %697 = vst [vmem:[%s332] sm:$0xff] %v696
        %s698 = sand.u32 %s171, 1
        %s699 = scalar_lea.sflag [#allocation4], %s698
        %s700 = sand.u32 %s171, 1
        %s701 = smul.addr %s700, 8
        %s702 = scalar_lea.vmem [#allocation10], %s701
        // Predicated region
        $region61: #{tpu_custom_call.1} parent=43 // pred_check
          %p703 = pneg %p181
        $region62: #{tpu_custom_call.1} parent=43 // pred_check_branch
          %705 = sbr.rel (%p703) target = $region64
        $region63: #{tpu_custom_call.1} parent=43 // pred_region
          %s707 = ssub.s32 128, 128
          %708 = vsyncadd %s699, %s707
          %s709 = smul.addr %s27, 128
          %s710 = scalar_lea.hbm %s6, %s709
          %s712 = sshll.u32 %s702, 4
          %s713 = int_to_ptr.vmem [resolvable:$true] %s712
          %715 = dma.vmem_to_hbm [thread:$0]  %s713, 128, %s710, %s699
        $region64: #{tpu_custom_call.1} parent=43 // pred_fallthru
          _
      $region44: #{tpu_custom_call.1} parent=5 // pred_fallthru
        _
      %p716 = scmp.le.s32.totalorder 2, %s22
      // Predicated region
      $region65: #{tpu_custom_call.1} parent=5 // pred_check
        %p717 = pneg %p716
      $region66: #{tpu_custom_call.1} parent=5 // pred_check_branch
        %719 = sbr.rel (%p717) target = $region68
      $region67: #{tpu_custom_call.1} parent=5 // pred_region
        %s720 = ssub.s32 %s22, 2
        // Predicated region
        $region69: #{tpu_custom_call.1} parent=67 // pred_check
          %p721 = pneg %p187
        $region70: #{tpu_custom_call.1} parent=67 // pred_check_branch
          %723 = sbr.rel (%p721) target = $region72
        $region71: #{tpu_custom_call.1} parent=67 // pred_region
          %s724 = sand.u32 %s172, 1
          %s725 = scalar_lea.sflag [#allocation4], %s724
          %s726 = sand.u32 %s172, 1
          %s727 = smul.addr %s726, 8
          %s728 = scalar_lea.vmem [#allocation10], %s727
          %729 = dma.done %s725, 128
        $region72: #{tpu_custom_call.1} parent=67 // pred_fallthru
          _
      $region68: #{tpu_custom_call.1} parent=5 // pred_fallthru
        _
    $region6: #{tpu_custom_call.1} parent=1 // loop_footer
      %s26 = sadd.s32 1, %s22
    $region7: #{tpu_custom_call.1} parent=1 // loop_footer_branch
      %21 = sbr.rel target = $region3
    $region8: #{tpu_custom_call.1} parent=1 // loop_exit
      _
    %730 = vsyncpa [#allocation3], 1
    %s731 = scalar_lea.sflag [#allocation3], 1
    %732 = vsyncpa %s731, 1
    %733 = vsyncpa [#allocation6], 1
    %s734 = scalar_lea.sflag [#allocation6], 1
    %735 = vsyncpa %s734, 1
    %736 = vsyncpa [#allocation9], 1
    %737 = vsyncpa [#allocation4], 1
    %s738 = scalar_lea.sflag [#allocation4], 1
    %739 = vsyncpa %s738, 1

</llo_original>
